<compile_context>
chip_gen: v5e
topology: v5e:2x2
jax: 0.10.0
libtpu: 0.0.40
codegen_flags: <defaults>
</compile_context>

<pallas_src>
import functools

import jax
import jax.numpy as jnp
from jax.experimental import pallas as pl
from jax.experimental.pallas import tpu as pltpu

EPS = 1e-6


def _round_up(x, m):
    return (x + m - 1) // m * m


def _pick_b_tile(n):
    # Amortize per-grid-step overhead, but keep >= 2 grid steps (v7x: 2 TCs).
    for bt in (8, 4, 2):
        if n % bt == 0 and n // bt >= 2:
            return bt
    return 1


def conv_block_kernel(H, W, b_tile, x_ref, w1_ref, g_ref, be_ref, w2_ref,
                      b2_ref, m_ref, o_ref, col_ref):
    # x_ref  : (B_TILE, Cin_p, HW)  channels on sublanes, spatial on lanes
    # w1_ref : (Cin_p, 9*Cin_p)     conv1 weights, column index = k*Cin_p + ci
    # g_ref / be_ref : (Cin_p, 1)   InstanceNorm gamma / beta (zero on padded ch)
    # w2_ref : (Cout, 9*Cin_p)
    # b2_ref : (Cout, 1)
    # m_ref  : (9, 1, HW)           per-tap SAME zero-padding masks
    # o_ref  : (B_TILE, Cout, HW)   lane-dense output
    # col_ref: (9*Cin_p, HW) VMEM   im2col scratch, reused for both convs
    hw = H * W
    cin_p = x_ref.shape[1]
    inv_hw = 1.0 / float(hw)

    w1 = w1_ref[...]
    w2 = w2_ref[...]
    gamma = g_ref[...]
    beta = be_ref[...]
    b2 = b2_ref[...]
    masks = m_ref[...]                                  # (9, 1, HW)
    tap_masks = [masks[k] for k in range(9)]            # each (1, HW)

    # Static lane-roll per 3x3 tap; wrap-around lanes are zeroed by the masks.
    shifts = [(-((ky - 1) * W + (kx - 1))) % hw
              for ky in range(3) for kx in range(3)]

    def im2col(v):
        # v: (Cin_p, HW) -> fills col_ref with 9 masked lane-rotations.
        for k, sh in enumerate(shifts):
            rolled = v if sh == 0 else pltpu.roll(v, sh, axis=1)
            col_ref[k * cin_p:(k + 1) * cin_p, :] = rolled * tap_masks[k]

    for b in range(b_tile):          # static unroll over the batch tile
        x = x_ref[b]                 # (Cin_p, HW)

        # ---- conv1 (bias dropped: cancelled by InstanceNorm mean) ----------
        im2col(x)
        a1 = jnp.dot(w1, col_ref[...], preferred_element_type=jnp.float32)

        # ---- InstanceNorm2d: single-pass stats over H*W (lane axis) --------
        mean = jnp.sum(a1, axis=1, keepdims=True) * inv_hw
        ex2 = jnp.sum(a1 * a1, axis=1, keepdims=True) * inv_hw
        var = ex2 - mean * mean
        scale = jax.lax.rsqrt(var + EPS) * gamma
        shift = beta - mean * scale
        y = a1 * scale + shift

        # ---- ELU (alpha = 1) ------------------------------------------------
        y = jnp.where(y > 0, y, jnp.exp(y) - 1.0)

        # TODO(synk): Dropout(p=0.15) implemented as eval-mode identity (no RNG).

        # ---- conv2 ----------------------------------------------------------
        im2col(y)
        o_ref[b] = jnp.dot(w2, col_ref[...],
                           preferred_element_type=jnp.float32) + b2


@jax.jit
def conv_block_pallas(x_nchw, w1_oihw, b1, gamma, beta, w2_oihw, b2):
    # b1 (conv1 bias) is accepted for parity with the PyTorch module, but a
    # per-channel constant before InstanceNorm is a mathematical no-op, so it
    # is not sent to the kernel (saves one DMA input + one full-tile add).
    del b1
    N, Cin, H, W = x_nchw.shape
    Cout = w2_oihw.shape[0]
    HW = H * W
    Cin_p = _round_up(Cin, 8)
    pad_c = Cin_p - Cin
    b_tile = _pick_b_tile(N)
    grid_n = N // b_tile

    # Input: NCHW -> (N, Cin_p, H*W), zero-pad channels to a full sublane tile.
    x_flat = x_nchw.astype(jnp.float32).reshape(N, Cin, HW)
    x_flat = jnp.pad(x_flat, ((0, 0), (0, pad_c), (0, 0)))

    # Weights: OIHW -> (O, 9*Cin_p), column index = (ky*3+kx)*Cin_p + ci.
    def prep_w(w, pad_out):
        wt = jnp.transpose(w.astype(jnp.float32), (0, 2, 3, 1))   # (O,KH,KW,I)
        wt = jnp.pad(wt, ((0, pad_out), (0, 0), (0, 0), (0, pad_c)))
        return wt.reshape(w.shape[0] + pad_out, 9 * Cin_p)

    w1_mat = prep_w(w1_oihw, pad_c)        # (Cin_p, 9*Cin_p)
    w2_mat = prep_w(w2_oihw, 0)            # (Cout,  9*Cin_p)

    def prep_vec(v, n_pad):
        return jnp.pad(v.astype(jnp.float32), (0, n_pad)).reshape(-1, 1)

    g_r = prep_vec(gamma, pad_c)           # zero on padded channels keeps them 0
    be_r = prep_vec(beta, pad_c)
    b2_r = prep_vec(b2, 0)

    # Per-tap SAME-padding masks, (9, 1, HW); broadcast over channels in-kernel
    # (8x fewer mask bytes than a channel-broadcast tensor).
    rows = jnp.arange(H)[:, None]
    cols = jnp.arange(W)[None, :]
    mask_list = []
    for ky in range(3):
        for kx in range(3):
            oy, ox = ky - 1, kx - 1
            m = ((rows + oy >= 0) & (rows + oy < H) &
                 (cols + ox >= 0) & (cols + ox < W))
            mask_list.append(m.reshape(1, HW))
    masks = jnp.stack(mask_list).astype(jnp.float32)   # (9, 1, HW)

    kernel = functools.partial(conv_block_kernel, H, W, b_tile)

    out_flat = pl.pallas_call(
        kernel,
        out_shape=jax.ShapeDtypeStruct((N, Cout, HW), jnp.float32),
        grid_spec=pltpu.PrefetchScalarGridSpec(
            num_scalar_prefetch=0,
            grid=(grid_n,),
            in_specs=[
                pl.BlockSpec((b_tile, Cin_p, HW), lambda n: (n, 0, 0)),
                pl.BlockSpec((Cin_p, 9 * Cin_p), lambda n: (0, 0)),
                pl.BlockSpec((Cin_p, 1), lambda n: (0, 0)),
                pl.BlockSpec((Cin_p, 1), lambda n: (0, 0)),
                pl.BlockSpec((Cout, 9 * Cin_p), lambda n: (0, 0)),
                pl.BlockSpec((Cout, 1), lambda n: (0, 0)),
                pl.BlockSpec((9, 1, HW), lambda n: (0, 0, 0)),
            ],
            out_specs=pl.BlockSpec((b_tile, Cout, HW), lambda n: (n, 0, 0)),
            scratch_shapes=[pltpu.VMEM((9 * Cin_p, HW), jnp.float32)],
        ),
        compiler_params=pltpu.CompilerParams(
            dimension_semantics=("parallel",),
            # Live set ~ 2x(in block) + 2x(out block) + im2col scratch; tiny at
            # these shapes, but budgeted explicitly so scaling B_TILE stays
            # inside v7x's 64 MiB VMEM.
            vmem_limit_bytes=32 * 1024 * 1024,
        ),
    )(x_flat, w1_mat, g_r, be_r, w2_mat, b2_r, masks)

    return out_flat.reshape(N, Cout, H, W)


def conv_block_ref(x_nchw, w1_oihw, b1, gamma, beta, w2_oihw, b2):
    """Pure-JAX reference (mirrors the PyTorch forward, eval mode)."""
    dn = ('NCHW', 'OIHW', 'NCHW')
    y = jax.lax.conv_general_dilated(x_nchw, w1_oihw, (1, 1), 'SAME',
                                     dimension_numbers=dn)
    y = y + b1[None, :, None, None]
    mean = jnp.mean(y, axis=(2, 3), keepdims=True)
    var = jnp.mean((y - mean) ** 2, axis=(2, 3), keepdims=True)
    y = (y - mean) / jnp.sqrt(var + EPS)
    y = y * gamma[None, :, None, None] + beta[None, :, None, None]
    y = jnp.where(y > 0, y, jnp.exp(y) - 1.0)
    y = jax.lax.conv_general_dilated(y, w2_oihw, (1, 1), 'SAME',
                                     dimension_numbers=dn)
    return y + b2[None, :, None, None]


def _run_case(key, N, IN_C, OUT_C, H, W):
    kx, k1, kb1, kg, kbe, k2, kb2 = jax.random.split(key, 7)
    x = jax.random.normal(kx, (N, IN_C, H, W), jnp.float32)
    w1 = jax.random.normal(k1, (IN_C, IN_C, 3, 3), jnp.float32) * 0.2
    b1 = jax.random.normal(kb1, (IN_C,), jnp.float32) * 0.1
    gamma = 1.0 + 0.1 * jax.random.normal(kg, (IN_C,), jnp.float32)
    beta = 0.1 * jax.random.normal(kbe, (IN_C,), jnp.float32)
    w2 = jax.random.normal(k2, (OUT_C, IN_C, 3, 3), jnp.float32) * 0.2
    b2 = jax.random.normal(kb2, (OUT_C,), jnp.float32) * 0.1

    out = conv_block_pallas(x, w1, b1, gamma, beta, w2, b2)
    out = jax.block_until_ready(out)

    ref = conv_block_ref(x, w1, b1, gamma, beta, w2, b2)
    assert out.shape == (N, OUT_C, H, W), out.shape
    max_err = float(jnp.max(jnp.abs(out - ref)))
    assert jnp.allclose(out, ref, rtol=1e-3, atol=1e-3), max_err


if __name__ == "__main__":
    key = jax.random.PRNGKey(0)
    k_a, k_b = jax.random.split(key)
    # Spec shapes: batch=2 -> B_TILE=1, grid=(2,) (keeps 2 steps for v7x TCs).
    _run_case(k_a, 2, 4, 8, 16, 16)
    # Larger batch exercises the batched path: batch=8 -> B_TILE=4, grid=(2,).
    _run_case(k_b, 8, 4, 8, 16, 16)
    print("KERNEL_OK")
</pallas_src>

<mosaic_0001>
module attributes {stable_mosaic.version = 11 : i64} {
  func.func @conv_block_kernel(%arg0: i32, %arg1: memref<1x8x256xf32, #tpu.memory_space<vmem>>, %arg2: memref<8x72xf32, #tpu.memory_space<vmem>>, %arg3: memref<8x1xf32, #tpu.memory_space<vmem>>, %arg4: memref<8x1xf32, #tpu.memory_space<vmem>>, %arg5: memref<8x72xf32, #tpu.memory_space<vmem>>, %arg6: memref<8x1xf32, #tpu.memory_space<vmem>>, %arg7: memref<9x1x256xf32, #tpu.memory_space<vmem>>, %arg8: memref<1x8x256xf32, #tpu.memory_space<vmem>>, %arg9: memref<72x256xf32, #tpu.memory_space<vmem>>) attributes {dimension_semantics = [#tpu.dimension_semantics<parallel>], iteration_bounds = array<i64: 2>, scalar_prefetch = 0 : i64, scratch_operands = 1 : i64, tpu.core_type = #tpu.core_type<tc>, window_params = [{transform_indices = @transform_0, window_bounds = array<i64: 1, 8, 256>}, {pipeline_mode = #tpu.pipeline_mode<synchronous>, transform_indices = @transform_1, window_bounds = array<i64: 8, 72>}, {pipeline_mode = #tpu.pipeline_mode<synchronous>, transform_indices = @transform_2, window_bounds = array<i64: 8, 1>}, {pipeline_mode = #tpu.pipeline_mode<synchronous>, transform_indices = @transform_3, window_bounds = array<i64: 8, 1>}, {pipeline_mode = #tpu.pipeline_mode<synchronous>, transform_indices = @transform_4, window_bounds = array<i64: 8, 72>}, {pipeline_mode = #tpu.pipeline_mode<synchronous>, transform_indices = @transform_5, window_bounds = array<i64: 8, 1>}, {pipeline_mode = #tpu.pipeline_mode<synchronous>, transform_indices = @transform_6, window_bounds = array<i64: 9, 1, 256>}, {transform_indices = @transform_7, window_bounds = array<i64: 1, 8, 256>}]} {
    %c0 = arith.constant 0 : index
    %c0_0 = arith.constant 0 : index
    %0 = vector.load %arg2[%c0, %c0_0] : memref<8x72xf32, #tpu.memory_space<vmem>>, vector<8x72xf32>
    %c0_1 = arith.constant 0 : index
    %c0_2 = arith.constant 0 : index
    %1 = vector.load %arg5[%c0_1, %c0_2] : memref<8x72xf32, #tpu.memory_space<vmem>>, vector<8x72xf32>
    %c0_3 = arith.constant 0 : index
    %c0_4 = arith.constant 0 : index
    %2 = vector.load %arg3[%c0_3, %c0_4] : memref<8x1xf32, #tpu.memory_space<vmem>>, vector<8x1xf32>
    %c0_5 = arith.constant 0 : index
    %c0_6 = arith.constant 0 : index
    %3 = vector.load %arg4[%c0_5, %c0_6] : memref<8x1xf32, #tpu.memory_space<vmem>>, vector<8x1xf32>
    %c0_7 = arith.constant 0 : index
    %c0_8 = arith.constant 0 : index
    %4 = vector.load %arg6[%c0_7, %c0_8] : memref<8x1xf32, #tpu.memory_space<vmem>>, vector<8x1xf32>
    %c0_9 = arith.constant 0 : index
    %c0_10 = arith.constant 0 : index
    %c0_11 = arith.constant 0 : index
    %5 = vector.load %arg7[%c0_9, %c0_10, %c0_11] : memref<9x1x256xf32, #tpu.memory_space<vmem>>, vector<9x1x256xf32>
    %6 = vector.extract_strided_slice %5 {offsets = [0, 0, 0], sizes = [1, 1, 256], strides = [1, 1, 1]} : vector<9x1x256xf32> to vector<1x1x256xf32>
    %7 = vector.shape_cast %6 : vector<1x1x256xf32> to vector<1x256xf32>
    %8 = vector.extract_strided_slice %5 {offsets = [1, 0, 0], sizes = [1, 1, 256], strides = [1, 1, 1]} : vector<9x1x256xf32> to vector<1x1x256xf32>
    %9 = vector.shape_cast %8 : vector<1x1x256xf32> to vector<1x256xf32>
    %10 = vector.extract_strided_slice %5 {offsets = [2, 0, 0], sizes = [1, 1, 256], strides = [1, 1, 1]} : vector<9x1x256xf32> to vector<1x1x256xf32>
    %11 = vector.shape_cast %10 : vector<1x1x256xf32> to vector<1x256xf32>
    %12 = vector.extract_strided_slice %5 {offsets = [3, 0, 0], sizes = [1, 1, 256], strides = [1, 1, 1]} : vector<9x1x256xf32> to vector<1x1x256xf32>
    %13 = vector.shape_cast %12 : vector<1x1x256xf32> to vector<1x256xf32>
    %14 = vector.extract_strided_slice %5 {offsets = [4, 0, 0], sizes = [1, 1, 256], strides = [1, 1, 1]} : vector<9x1x256xf32> to vector<1x1x256xf32>
    %15 = vector.shape_cast %14 : vector<1x1x256xf32> to vector<1x256xf32>
    %16 = vector.extract_strided_slice %5 {offsets = [5, 0, 0], sizes = [1, 1, 256], strides = [1, 1, 1]} : vector<9x1x256xf32> to vector<1x1x256xf32>
    %17 = vector.shape_cast %16 : vector<1x1x256xf32> to vector<1x256xf32>
    %18 = vector.extract_strided_slice %5 {offsets = [6, 0, 0], sizes = [1, 1, 256], strides = [1, 1, 1]} : vector<9x1x256xf32> to vector<1x1x256xf32>
    %19 = vector.shape_cast %18 : vector<1x1x256xf32> to vector<1x256xf32>
    %20 = vector.extract_strided_slice %5 {offsets = [7, 0, 0], sizes = [1, 1, 256], strides = [1, 1, 1]} : vector<9x1x256xf32> to vector<1x1x256xf32>
    %21 = vector.shape_cast %20 : vector<1x1x256xf32> to vector<1x256xf32>
    %22 = vector.extract_strided_slice %5 {offsets = [8, 0, 0], sizes = [1, 1, 256], strides = [1, 1, 1]} : vector<9x1x256xf32> to vector<1x1x256xf32>
    %23 = vector.shape_cast %22 : vector<1x1x256xf32> to vector<1x256xf32>
    %c0_12 = arith.constant 0 : index
    %c0_13 = arith.constant 0 : index
    %c0_14 = arith.constant 0 : index
    %24 = vector.load %arg1[%c0_12, %c0_13, %c0_14] : memref<1x8x256xf32, #tpu.memory_space<vmem>>, vector<1x8x256xf32>
    %25 = vector.shape_cast %24 : vector<1x8x256xf32> to vector<8x256xf32>
    %c17_i32 = arith.constant 17 : i32
    %26 = tpu.dynamic_rotate %25 by %c17_i32 dim 1 : vector<8x256xf32>, i32 -> vector<8x256xf32>
    %27 = vector.broadcast %7 : vector<1x256xf32> to vector<8x256xf32>
    %28 = arith.mulf %26, %27 : vector<8x256xf32>
    %c0_15 = arith.constant 0 : index
    %c0_16 = arith.constant 0 : index
    %29 = vector.load %arg9[%c0_15, %c0_16] : memref<72x256xf32, #tpu.memory_space<vmem>>, vector<8x256xf32>
    tpu.vector_store %arg9[%c0_15, %c0_16], %28 {strides = array<i32>} : memref<72x256xf32, #tpu.memory_space<vmem>>, vector<8x256xf32>,
    %c16_i32 = arith.constant 16 : i32
    %30 = tpu.dynamic_rotate %25 by %c16_i32 dim 1 : vector<8x256xf32>, i32 -> vector<8x256xf32>
    %31 = vector.broadcast %9 : vector<1x256xf32> to vector<8x256xf32>
    %32 = arith.mulf %30, %31 : vector<8x256xf32>
    %c8 = arith.constant 8 : index
    %c0_17 = arith.constant 0 : index
    %33 = vector.load %arg9[%c8, %c0_17] : memref<72x256xf32, #tpu.memory_space<vmem>>, vector<8x256xf32>
    tpu.vector_store %arg9[%c8, %c0_17], %32 {strides = array<i32>} : memref<72x256xf32, #tpu.memory_space<vmem>>, vector<8x256xf32>,
    %c15_i32 = arith.constant 15 : i32
    %34 = tpu.dynamic_rotate %25 by %c15_i32 dim 1 : vector<8x256xf32>, i32 -> vector<8x256xf32>
    %35 = vector.broadcast %11 : vector<1x256xf32> to vector<8x256xf32>
    %36 = arith.mulf %34, %35 : vector<8x256xf32>
    %c16 = arith.constant 16 : index
    %c0_18 = arith.constant 0 : index
    %37 = vector.load %arg9[%c16, %c0_18] : memref<72x256xf32, #tpu.memory_space<vmem>>, vector<8x256xf32>
    tpu.vector_store %arg9[%c16, %c0_18], %36 {strides = array<i32>} : memref<72x256xf32, #tpu.memory_space<vmem>>, vector<8x256xf32>,
    %c1_i32 = arith.constant 1 : i32
    %38 = tpu.dynamic_rotate %25 by %c1_i32 dim 1 : vector<8x256xf32>, i32 -> vector<8x256xf32>
    %39 = vector.broadcast %13 : vector<1x256xf32> to vector<8x256xf32>
    %40 = arith.mulf %38, %39 : vector<8x256xf32>
    %c24 = arith.constant 24 : index
    %c0_19 = arith.constant 0 : index
    %41 = vector.load %arg9[%c24, %c0_19] : memref<72x256xf32, #tpu.memory_space<vmem>>, vector<8x256xf32>
    tpu.vector_store %arg9[%c24, %c0_19], %40 {strides = array<i32>} : memref<72x256xf32, #tpu.memory_space<vmem>>, vector<8x256xf32>,
    %42 = vector.broadcast %15 : vector<1x256xf32> to vector<8x256xf32>
    %43 = arith.mulf %25, %42 : vector<8x256xf32>
    %c32 = arith.constant 32 : index
    %c0_20 = arith.constant 0 : index
    %44 = vector.load %arg9[%c32, %c0_20] : memref<72x256xf32, #tpu.memory_space<vmem>>, vector<8x256xf32>
    tpu.vector_store %arg9[%c32, %c0_20], %43 {strides = array<i32>} : memref<72x256xf32, #tpu.memory_space<vmem>>, vector<8x256xf32>,
    %c255_i32 = arith.constant 255 : i32
    %45 = tpu.dynamic_rotate %25 by %c255_i32 dim 1 : vector<8x256xf32>, i32 -> vector<8x256xf32>
    %46 = vector.broadcast %17 : vector<1x256xf32> to vector<8x256xf32>
    %47 = arith.mulf %45, %46 : vector<8x256xf32>
    %c40 = arith.constant 40 : index
    %c0_21 = arith.constant 0 : index
    %48 = vector.load %arg9[%c40, %c0_21] : memref<72x256xf32, #tpu.memory_space<vmem>>, vector<8x256xf32>
    tpu.vector_store %arg9[%c40, %c0_21], %47 {strides = array<i32>} : memref<72x256xf32, #tpu.memory_space<vmem>>, vector<8x256xf32>,
    %c241_i32 = arith.constant 241 : i32
    %49 = tpu.dynamic_rotate %25 by %c241_i32 dim 1 : vector<8x256xf32>, i32 -> vector<8x256xf32>
    %50 = vector.broadcast %19 : vector<1x256xf32> to vector<8x256xf32>
    %51 = arith.mulf %49, %50 : vector<8x256xf32>
    %c48 = arith.constant 48 : index
    %c0_22 = arith.constant 0 : index
    %52 = vector.load %arg9[%c48, %c0_22] : memref<72x256xf32, #tpu.memory_space<vmem>>, vector<8x256xf32>
    tpu.vector_store %arg9[%c48, %c0_22], %51 {strides = array<i32>} : memref<72x256xf32, #tpu.memory_space<vmem>>, vector<8x256xf32>,
    %c240_i32 = arith.constant 240 : i32
    %53 = tpu.dynamic_rotate %25 by %c240_i32 dim 1 : vector<8x256xf32>, i32 -> vector<8x256xf32>
    %54 = vector.broadcast %21 : vector<1x256xf32> to vector<8x256xf32>
    %55 = arith.mulf %53, %54 : vector<8x256xf32>
    %c56 = arith.constant 56 : index
    %c0_23 = arith.constant 0 : index
    %56 = vector.load %arg9[%c56, %c0_23] : memref<72x256xf32, #tpu.memory_space<vmem>>, vector<8x256xf32>
    tpu.vector_store %arg9[%c56, %c0_23], %55 {strides = array<i32>} : memref<72x256xf32, #tpu.memory_space<vmem>>, vector<8x256xf32>,
    %c239_i32 = arith.constant 239 : i32
    %57 = tpu.dynamic_rotate %25 by %c239_i32 dim 1 : vector<8x256xf32>, i32 -> vector<8x256xf32>
    %58 = vector.broadcast %23 : vector<1x256xf32> to vector<8x256xf32>
    %59 = arith.mulf %57, %58 : vector<8x256xf32>
    %c64 = arith.constant 64 : index
    %c0_24 = arith.constant 0 : index
    %60 = vector.load %arg9[%c64, %c0_24] : memref<72x256xf32, #tpu.memory_space<vmem>>, vector<8x256xf32>
    tpu.vector_store %arg9[%c64, %c0_24], %59 {strides = array<i32>} : memref<72x256xf32, #tpu.memory_space<vmem>>, vector<8x256xf32>,
    %c0_25 = arith.constant 0 : index
    %c0_26 = arith.constant 0 : index
    %61 = vector.load %arg9[%c0_25, %c0_26] : memref<72x256xf32, #tpu.memory_space<vmem>>, vector<72x256xf32>
    %cst = arith.constant dense<0.000000e+00> : vector<8x256xf32>
    %62 = tpu.matmul %0, %61, %cst {dimension_numbers = #tpu.dot_dimension_numbers<[1], [0], [0], [1], [0, 0, 1, 1], [], []>} : vector<8x72xf32>, vector<72x256xf32>, vector<8x256xf32> -> vector<8x256xf32>
    %cst_27 = arith.constant dense<0.000000e+00> : vector<8xf32>
    %63 = vector.multi_reduction <add>, %62, %cst_27 [1] : vector<8x256xf32> to vector<8xf32>
    %64 = vector.shape_cast %63 : vector<8xf32> to vector<8x1xf32>
    %cst_28 = arith.constant 3.906250e-03 : f32
    %65 = vector.broadcast %cst_28 : f32 to vector<8x1xf32>
    %66 = arith.mulf %64, %65 : vector<8x1xf32>
    %67 = arith.mulf %62, %62 : vector<8x256xf32>
    %cst_29 = arith.constant dense<0.000000e+00> : vector<8xf32>
    %68 = vector.multi_reduction <add>, %67, %cst_29 [1] : vector<8x256xf32> to vector<8xf32>
    %69 = vector.shape_cast %68 : vector<8xf32> to vector<8x1xf32>
    %cst_30 = arith.constant 3.906250e-03 : f32
    %70 = vector.broadcast %cst_30 : f32 to vector<8x1xf32>
    %71 = arith.mulf %69, %70 : vector<8x1xf32>
    %72 = arith.mulf %66, %66 : vector<8x1xf32>
    %73 = arith.subf %71, %72 : vector<8x1xf32>
    %cst_31 = arith.constant 9.99999997E-7 : f32
    %74 = vector.broadcast %cst_31 : f32 to vector<8x1xf32>
    %75 = arith.addf %73, %74 : vector<8x1xf32>
    %76 = math.rsqrt %75 : vector<8x1xf32>
    %77 = arith.mulf %76, %2 : vector<8x1xf32>
    %78 = arith.mulf %66, %77 : vector<8x1xf32>
    %79 = arith.subf %3, %78 : vector<8x1xf32>
    %80 = vector.broadcast %77 : vector<8x1xf32> to vector<8x256xf32>
    %81 = arith.mulf %62, %80 : vector<8x256xf32>
    %82 = vector.broadcast %79 : vector<8x1xf32> to vector<8x256xf32>
    %83 = arith.addf %81, %82 : vector<8x256xf32>
    %cst_32 = arith.constant 0.000000e+00 : f32
    %84 = vector.broadcast %cst_32 : f32 to vector<8x256xf32>
    %85 = arith.cmpf ogt, %83, %84 : vector<8x256xf32>
    %86 = math.exp %83 : vector<8x256xf32>
    %cst_33 = arith.constant 1.000000e+00 : f32
    %87 = vector.broadcast %cst_33 : f32 to vector<8x256xf32>
    %88 = arith.subf %86, %87 : vector<8x256xf32>
    %89 = arith.select %85, %83, %88 : vector<8x256xi1>, vector<8x256xf32>
    %c17_i32_34 = arith.constant 17 : i32
    %90 = tpu.dynamic_rotate %89 by %c17_i32_34 dim 1 : vector<8x256xf32>, i32 -> vector<8x256xf32>
    %91 = vector.broadcast %7 : vector<1x256xf32> to vector<8x256xf32>
    %92 = arith.mulf %90, %91 : vector<8x256xf32>
    %c0_35 = arith.constant 0 : index
    %c0_36 = arith.constant 0 : index
    %93 = vector.load %arg9[%c0_35, %c0_36] : memref<72x256xf32, #tpu.memory_space<vmem>>, vector<8x256xf32>
    tpu.vector_store %arg9[%c0_35, %c0_36], %92 {strides = array<i32>} : memref<72x256xf32, #tpu.memory_space<vmem>>, vector<8x256xf32>,
    %c16_i32_37 = arith.constant 16 : i32
    %94 = tpu.dynamic_rotate %89 by %c16_i32_37 dim 1 : vector<8x256xf32>, i32 -> vector<8x256xf32>
    %95 = vector.broadcast %9 : vector<1x256xf32> to vector<8x256xf32>
    %96 = arith.mulf %94, %95 : vector<8x256xf32>
    %c8_38 = arith.constant 8 : index
    %c0_39 = arith.constant 0 : index
    %97 = vector.load %arg9[%c8_38, %c0_39] : memref<72x256xf32, #tpu.memory_space<vmem>>, vector<8x256xf32>
    tpu.vector_store %arg9[%c8_38, %c0_39], %96 {strides = array<i32>} : memref<72x256xf32, #tpu.memory_space<vmem>>, vector<8x256xf32>,
    %c15_i32_40 = arith.constant 15 : i32
    %98 = tpu.dynamic_rotate %89 by %c15_i32_40 dim 1 : vector<8x256xf32>, i32 -> vector<8x256xf32>
    %99 = vector.broadcast %11 : vector<1x256xf32> to vector<8x256xf32>
    %100 = arith.mulf %98, %99 : vector<8x256xf32>
    %c16_41 = arith.constant 16 : index
    %c0_42 = arith.constant 0 : index
    %101 = vector.load %arg9[%c16_41, %c0_42] : memref<72x256xf32, #tpu.memory_space<vmem>>, vector<8x256xf32>
    tpu.vector_store %arg9[%c16_41, %c0_42], %100 {strides = array<i32>} : memref<72x256xf32, #tpu.memory_space<vmem>>, vector<8x256xf32>,
    %c1_i32_43 = arith.constant 1 : i32
    %102 = tpu.dynamic_rotate %89 by %c1_i32_43 dim 1 : vector<8x256xf32>, i32 -> vector<8x256xf32>
    %103 = vector.broadcast %13 : vector<1x256xf32> to vector<8x256xf32>
    %104 = arith.mulf %102, %103 : vector<8x256xf32>
    %c24_44 = arith.constant 24 : index
    %c0_45 = arith.constant 0 : index
    %105 = vector.load %arg9[%c24_44, %c0_45] : memref<72x256xf32, #tpu.memory_space<vmem>>, vector<8x256xf32>
    tpu.vector_store %arg9[%c24_44, %c0_45], %104 {strides = array<i32>} : memref<72x256xf32, #tpu.memory_space<vmem>>, vector<8x256xf32>,
    %106 = vector.broadcast %15 : vector<1x256xf32> to vector<8x256xf32>
    %107 = arith.mulf %89, %106 : vector<8x256xf32>
    %c32_46 = arith.constant 32 : index
    %c0_47 = arith.constant 0 : index
    %108 = vector.load %arg9[%c32_46, %c0_47] : memref<72x256xf32, #tpu.memory_space<vmem>>, vector<8x256xf32>
    tpu.vector_store %arg9[%c32_46, %c0_47], %107 {strides = array<i32>} : memref<72x256xf32, #tpu.memory_space<vmem>>, vector<8x256xf32>,
    %c255_i32_48 = arith.constant 255 : i32
    %109 = tpu.dynamic_rotate %89 by %c255_i32_48 dim 1 : vector<8x256xf32>, i32 -> vector<8x256xf32>
    %110 = vector.broadcast %17 : vector<1x256xf32> to vector<8x256xf32>
    %111 = arith.mulf %109, %110 : vector<8x256xf32>
    %c40_49 = arith.constant 40 : index
    %c0_50 = arith.constant 0 : index
    %112 = vector.load %arg9[%c40_49, %c0_50] : memref<72x256xf32, #tpu.memory_space<vmem>>, vector<8x256xf32>
    tpu.vector_store %arg9[%c40_49, %c0_50], %111 {strides = array<i32>} : memref<72x256xf32, #tpu.memory_space<vmem>>, vector<8x256xf32>,
    %c241_i32_51 = arith.constant 241 : i32
    %113 = tpu.dynamic_rotate %89 by %c241_i32_51 dim 1 : vector<8x256xf32>, i32 -> vector<8x256xf32>
    %114 = vector.broadcast %19 : vector<1x256xf32> to vector<8x256xf32>
    %115 = arith.mulf %113, %114 : vector<8x256xf32>
    %c48_52 = arith.constant 48 : index
    %c0_53 = arith.constant 0 : index
    %116 = vector.load %arg9[%c48_52, %c0_53] : memref<72x256xf32, #tpu.memory_space<vmem>>, vector<8x256xf32>
    tpu.vector_store %arg9[%c48_52, %c0_53], %115 {strides = array<i32>} : memref<72x256xf32, #tpu.memory_space<vmem>>, vector<8x256xf32>,
    %c240_i32_54 = arith.constant 240 : i32
    %117 = tpu.dynamic_rotate %89 by %c240_i32_54 dim 1 : vector<8x256xf32>, i32 -> vector<8x256xf32>
    %118 = vector.broadcast %21 : vector<1x256xf32> to vector<8x256xf32>
    %119 = arith.mulf %117, %118 : vector<8x256xf32>
    %c56_55 = arith.constant 56 : index
    %c0_56 = arith.constant 0 : index
    %120 = vector.load %arg9[%c56_55, %c0_56] : memref<72x256xf32, #tpu.memory_space<vmem>>, vector<8x256xf32>
    tpu.vector_store %arg9[%c56_55, %c0_56], %119 {strides = array<i32>} : memref<72x256xf32, #tpu.memory_space<vmem>>, vector<8x256xf32>,
    %c239_i32_57 = arith.constant 239 : i32
    %121 = tpu.dynamic_rotate %89 by %c239_i32_57 dim 1 : vector<8x256xf32>, i32 -> vector<8x256xf32>
    %122 = vector.broadcast %23 : vector<1x256xf32> to vector<8x256xf32>
    %123 = arith.mulf %121, %122 : vector<8x256xf32>
    %c64_58 = arith.constant 64 : index
    %c0_59 = arith.constant 0 : index
    %124 = vector.load %arg9[%c64_58, %c0_59] : memref<72x256xf32, #tpu.memory_space<vmem>>, vector<8x256xf32>
    tpu.vector_store %arg9[%c64_58, %c0_59], %123 {strides = array<i32>} : memref<72x256xf32, #tpu.memory_space<vmem>>, vector<8x256xf32>,
    %c0_60 = arith.constant 0 : index
    %c0_61 = arith.constant 0 : index
    %125 = vector.load %arg9[%c0_60, %c0_61] : memref<72x256xf32, #tpu.memory_space<vmem>>, vector<72x256xf32>
    %cst_62 = arith.constant dense<0.000000e+00> : vector<8x256xf32>
    %126 = tpu.matmul %1, %125, %cst_62 {dimension_numbers = #tpu.dot_dimension_numbers<[1], [0], [0], [1], [0, 0, 1, 1], [], []>} : vector<8x72xf32>, vector<72x256xf32>, vector<8x256xf32> -> vector<8x256xf32>
    %127 = vector.broadcast %4 : vector<8x1xf32> to vector<8x256xf32>
    %128 = arith.addf %126, %127 : vector<8x256xf32>
    %c0_63 = arith.constant 0 : index
    %c0_64 = arith.constant 0 : index
    %c0_65 = arith.constant 0 : index
    %129 = vector.load %arg8[%c0_63, %c0_64, %c0_65] : memref<1x8x256xf32, #tpu.memory_space<vmem>>, vector<1x8x256xf32>
    %130 = vector.shape_cast %129 : vector<1x8x256xf32> to vector<8x256xf32>
    %131 = vector.shape_cast %128 : vector<8x256xf32> to vector<1x8x256xf32>
    tpu.vector_store %arg8[%c0_63, %c0_64, %c0_65], %131 {strides = array<i32>} : memref<1x8x256xf32, #tpu.memory_space<vmem>>, vector<1x8x256xf32>,
    return
  }
  func.func @transform_0(%arg0: i32) -> (i32, i32, i32) {
    %c0_i32 = arith.constant 0 : i32
    %c0_i32_0 = arith.constant 0 : i32
    %c0_i32_1 = arith.constant 0 : i32
    return %arg0, %c0_i32, %c0_i32_0 : i32, i32, i32
  }
  func.func @transform_1(%arg0: i32) -> (i32, i32) {
    %c0_i32 = arith.constant 0 : i32
    %c0_i32_0 = arith.constant 0 : i32
    %c0_i32_1 = arith.constant 0 : i32
    return %c0_i32, %c0_i32_0 : i32, i32
  }
  func.func @transform_2(%arg0: i32) -> (i32, i32) {
    %c0_i32 = arith.constant 0 : i32
    %c0_i32_0 = arith.constant 0 : i32
    %c0_i32_1 = arith.constant 0 : i32
    return %c0_i32, %c0_i32_0 : i32, i32
  }
  func.func @transform_3(%arg0: i32) -> (i32, i32) {
    %c0_i32 = arith.constant 0 : i32
    %c0_i32_0 = arith.constant 0 : i32
    %c0_i32_1 = arith.constant 0 : i32
    return %c0_i32, %c0_i32_0 : i32, i32
  }
  func.func @transform_4(%arg0: i32) -> (i32, i32) {
    %c0_i32 = arith.constant 0 : i32
    %c0_i32_0 = arith.constant 0 : i32
    %c0_i32_1 = arith.constant 0 : i32
    return %c0_i32, %c0_i32_0 : i32, i32
  }
  func.func @transform_5(%arg0: i32) -> (i32, i32) {
    %c0_i32 = arith.constant 0 : i32
    %c0_i32_0 = arith.constant 0 : i32
    %c0_i32_1 = arith.constant 0 : i32
    return %c0_i32, %c0_i32_0 : i32, i32
  }
  func.func @transform_6(%arg0: i32) -> (i32, i32, i32) {
    %c0_i32 = arith.constant 0 : i32
    %c0_i32_0 = arith.constant 0 : i32
    %c0_i32_1 = arith.constant 0 : i32
    %c0_i32_2 = arith.constant 0 : i32
    return %c0_i32, %c0_i32_0, %c0_i32_1 : i32, i32, i32
  }
  func.func @transform_7(%arg0: i32) -> (i32, i32, i32) {
    %c0_i32 = arith.constant 0 : i32
    %c0_i32_0 = arith.constant 0 : i32
    %c0_i32_1 = arith.constant 0 : i32
    return %arg0, %c0_i32, %c0_i32_0 : i32, i32, i32
  }
}

</mosaic_0001>

<llo_original>
// kernel: conv_block_pallas.1
$region0: #{conv_block_pallas.1}
  #allocation0 [shape = 'u32[]', space=smem, size = 0x4, offset = 0x4, fixed_abs, tag = 'smem constant byte address 0x4 - core index']
  #allocation1 [shape = 'u32[72,128]{1,0:T(1,128)}', space=vmem, size = 0x9000, scoped, tag = 'internal scratch']
  #allocation2 [shape = 'f32[72,256]{1,0:T(8,128)}', space=vmem, size = 0x12000, scoped, tag = 'scratch operand']
  %s0 = inlined_call_operand.vmem [shape: f32[2,8,256], index: 0, kind: input, shape index: {}]
  %s1 = inlined_call_operand.vmem [shape: f32[8,72], index: 1, kind: input, shape index: {}]
  %s2 = inlined_call_operand.vmem [shape: f32[8,1], index: 2, kind: input, shape index: {}]
  %s3 = inlined_call_operand.vmem [shape: f32[8,1], index: 3, kind: input, shape index: {}]
  %s4 = inlined_call_operand.vmem [shape: f32[8,72], index: 4, kind: input, shape index: {}]
  %s5 = inlined_call_operand.vmem [shape: f32[8,1], index: 5, kind: input, shape index: {}]
  %s6 = inlined_call_operand.vmem [shape: f32[9,1,256], index: 6, kind: input, shape index: {}]
  %s7 = inlined_call_operand.vmem [shape: f32[2,8,256], index: 7, kind: output, shape index: {}]
  %s8 = sld [smem:[#allocation0]]
  $region61: #{conv_block_pallas.1} parent=0
    _
  %s10 = ssub.s32 1, %s8
  %s11 = scalar_select 0, %s10, %s8
  loop: start=0, step=1, limit=4
  $region2: #{conv_block_pallas.1} parent=0 // loop_pre_header
    _
  $region3: #{conv_block_pallas.1} parent=0 // loop_header
    %s13 = sphi 0, %s17
    %p14 = scmp.ge.s32.totalorder %s13, 4
    %s23 = sphi 0, %s25
    %s26 = sphi 0, %s23
    %s27 = sphi 0, %s26
    %s43 = sphi 0, %s27
    %s47 = sphi 0, %s47
    %s49 = sphi 0, %s47
    %s50 = sphi 0, %s49
    %s64 = sphi 0, %s50
    %s68 = sphi 0, %s68
    %s70 = sphi 0, %s68
    %s71 = sphi 0, %s70
    %s85 = sphi 0, %s71
    %s89 = sphi 0, %s89
    %s91 = sphi 0, %s89
    %s92 = sphi 0, %s91
    %s106 = sphi 0, %s92
    %s110 = sphi 0, %s110
    %s112 = sphi 0, %s110
    %s113 = sphi 0, %s112
    %s127 = sphi 0, %s113
    %s131 = sphi 0, %s131
    %s133 = sphi 0, %s131
    %s134 = sphi 0, %s133
    %s148 = sphi 0, %s134
    %s152 = sphi 0, %s152
    %s154 = sphi 0, %s152
    %s155 = sphi 0, %s154
    %s169 = sphi 0, %s155
    %s175 = sphi 0, %s177
    %s178 = sphi 0, %s175
    %s179 = sphi 0, %s178
    %s195 = sphi 0, %s179
  $region4: #{conv_block_pallas.1} parent=0 // loop_header_branch
    %16 = sbr.rel (%p14) target = $region8
  $region5: #{conv_block_pallas.1} parent=0 // loop_body
    %s18 = ssub.s32 %s13, 1
    %s19 = ssub.s32 %s13, 2
    %s20 = sadd.s32 %s13, 1
    %s21 = ssub.s32 %s13, %s20
    %p22 = scmp.eq.s32.totalorder %s21, 0
    %s24 = sadd.s32 %s23, 1
    %s25 = scalar_select %p22, %s23, %s24
    %p28 = pneg %p22
    %p29 = scmp.eq.s32.totalorder %s13, 1
    %p30 = por %p28, %p29
    %p31 = scmp.ne.s32.totalorder %s23, %s26
    %p32 = scmp.eq.s32.totalorder %s13, 0
    %p33 = por %p31, %p32
    %p34 = scmp.ne.s32.totalorder %s23, %s26
    %p35 = scmp.eq.s32.totalorder %s18, 1
    %p36 = por %p34, %p35
    %p37 = scmp.ne.s32.totalorder %s26, %s27
    %p38 = scmp.eq.s32.totalorder %s18, 0
    %p39 = por %p37, %p38
    %p40 = scmp.ne.s32.totalorder %s26, %s27
    %p41 = scmp.eq.s32.totalorder %s19, 1
    %p42 = por %p40, %p41
    %p44 = scmp.ne.s32.totalorder %s27, %s43
    %p45 = scmp.eq.s32.totalorder %s19, 0
    %p46 = por %p44, %p45
    %s48 = sadd.s32 %s47, 1
    %p51 = scmp.eq.s32.totalorder %s13, 1
    %p52 = scmp.ne.s32.totalorder %s47, %s49
    %p53 = scmp.eq.s32.totalorder %s13, 0
    %p54 = por %p52, %p53
    %p55 = scmp.ne.s32.totalorder %s47, %s49
    %p56 = scmp.eq.s32.totalorder %s18, 1
    %p57 = por %p55, %p56
    %p58 = scmp.ne.s32.totalorder %s49, %s50
    %p59 = scmp.eq.s32.totalorder %s18, 0
    %p60 = por %p58, %p59
    %p61 = scmp.ne.s32.totalorder %s49, %s50
    %p62 = scmp.eq.s32.totalorder %s19, 1
    %p63 = por %p61, %p62
    %p65 = scmp.ne.s32.totalorder %s50, %s64
    %p66 = scmp.eq.s32.totalorder %s19, 0
    %p67 = por %p65, %p66
    %s69 = sadd.s32 %s68, 1
    %p72 = scmp.eq.s32.totalorder %s13, 1
    %p73 = scmp.ne.s32.totalorder %s68, %s70
    %p74 = scmp.eq.s32.totalorder %s13, 0
    %p75 = por %p73, %p74
    %p76 = scmp.ne.s32.totalorder %s68, %s70
    %p77 = scmp.eq.s32.totalorder %s18, 1
    %p78 = por %p76, %p77
    %p79 = scmp.ne.s32.totalorder %s70, %s71
    %p80 = scmp.eq.s32.totalorder %s18, 0
    %p81 = por %p79, %p80
    %p82 = scmp.ne.s32.totalorder %s70, %s71
    %p83 = scmp.eq.s32.totalorder %s19, 1
    %p84 = por %p82, %p83
    %p86 = scmp.ne.s32.totalorder %s71, %s85
    %p87 = scmp.eq.s32.totalorder %s19, 0
    %p88 = por %p86, %p87
    %s90 = sadd.s32 %s89, 1
    %p93 = scmp.eq.s32.totalorder %s13, 1
    %p94 = scmp.ne.s32.totalorder %s89, %s91
    %p95 = scmp.eq.s32.totalorder %s13, 0
    %p96 = por %p94, %p95
    %p97 = scmp.ne.s32.totalorder %s89, %s91
    %p98 = scmp.eq.s32.totalorder %s18, 1
    %p99 = por %p97, %p98
    %p100 = scmp.ne.s32.totalorder %s91, %s92
    %p101 = scmp.eq.s32.totalorder %s18, 0
    %p102 = por %p100, %p101
    %p103 = scmp.ne.s32.totalorder %s91, %s92
    %p104 = scmp.eq.s32.totalorder %s19, 1
    %p105 = por %p103, %p104
    %p107 = scmp.ne.s32.totalorder %s92, %s106
    %p108 = scmp.eq.s32.totalorder %s19, 0
    %p109 = por %p107, %p108
    %s111 = sadd.s32 %s110, 1
    %p114 = scmp.eq.s32.totalorder %s13, 1
    %p115 = scmp.ne.s32.totalorder %s110, %s112
    %p116 = scmp.eq.s32.totalorder %s13, 0
    %p117 = por %p115, %p116
    %p118 = scmp.ne.s32.totalorder %s110, %s112
    %p119 = scmp.eq.s32.totalorder %s18, 1
    %p120 = por %p118, %p119
    %p121 = scmp.ne.s32.totalorder %s112, %s113
    %p122 = scmp.eq.s32.totalorder %s18, 0
    %p123 = por %p121, %p122
    %p124 = scmp.ne.s32.totalorder %s112, %s113
    %p125 = scmp.eq.s32.totalorder %s19, 1
    %p126 = por %p124, %p125
    %p128 = scmp.ne.s32.totalorder %s113, %s127
    %p129 = scmp.eq.s32.totalorder %s19, 0
    %p130 = por %p128, %p129
    %s132 = sadd.s32 %s131, 1
    %p135 = scmp.eq.s32.totalorder %s13, 1
    %p136 = scmp.ne.s32.totalorder %s131, %s133
    %p137 = scmp.eq.s32.totalorder %s13, 0
    %p138 = por %p136, %p137
    %p139 = scmp.ne.s32.totalorder %s131, %s133
    %p140 = scmp.eq.s32.totalorder %s18, 1
    %p141 = por %p139, %p140
    %p142 = scmp.ne.s32.totalorder %s133, %s134
    %p143 = scmp.eq.s32.totalorder %s18, 0
    %p144 = por %p142, %p143
    %p145 = scmp.ne.s32.totalorder %s133, %s134
    %p146 = scmp.eq.s32.totalorder %s19, 1
    %p147 = por %p145, %p146
    %p149 = scmp.ne.s32.totalorder %s134, %s148
    %p150 = scmp.eq.s32.totalorder %s19, 0
    %p151 = por %p149, %p150
    %s153 = sadd.s32 %s152, 1
    %p156 = scmp.eq.s32.totalorder %s13, 1
    %p157 = scmp.ne.s32.totalorder %s152, %s154
    %p158 = scmp.eq.s32.totalorder %s13, 0
    %p159 = por %p157, %p158
    %p160 = scmp.ne.s32.totalorder %s152, %s154
    %p161 = scmp.eq.s32.totalorder %s18, 1
    %p162 = por %p160, %p161
    %p163 = scmp.ne.s32.totalorder %s154, %s155
    %p164 = scmp.eq.s32.totalorder %s18, 0
    %p165 = por %p163, %p164
    %p166 = scmp.ne.s32.totalorder %s154, %s155
    %p167 = scmp.eq.s32.totalorder %s19, 1
    %p168 = por %p166, %p167
    %p170 = scmp.ne.s32.totalorder %s155, %s169
    %p171 = scmp.eq.s32.totalorder %s19, 0
    %p172 = por %p170, %p171
    %s173 = ssub.s32 %s13, %s20
    %p174 = scmp.eq.s32.totalorder %s173, 0
    %s176 = sadd.s32 %s175, 1
    %s177 = scalar_select %p174, %s175, %s176
    %p180 = pneg %p174
    %p181 = scmp.eq.s32.totalorder %s13, 1
    %p182 = por %p180, %p181
    %p183 = scmp.ne.s32.totalorder %s175, %s178
    %p184 = scmp.eq.s32.totalorder %s13, 0
    %p185 = por %p183, %p184
    %p186 = scmp.ne.s32.totalorder %s175, %s178
    %p187 = scmp.eq.s32.totalorder %s18, 1
    %p188 = por %p186, %p187
    %p189 = scmp.ne.s32.totalorder %s178, %s179
    %p190 = scmp.eq.s32.totalorder %s18, 0
    %p191 = por %p189, %p190
    %p192 = scmp.ne.s32.totalorder %s178, %s179
    %p193 = scmp.eq.s32.totalorder %s19, 1
    %p194 = por %p192, %p193
    %p196 = scmp.ne.s32.totalorder %s179, %s195
    %p197 = scmp.eq.s32.totalorder %s19, 0
    %p198 = por %p196, %p197
    %p199 = scmp.le.s32.totalorder 1, %s13
    %p200 = scmp.lt.s32.totalorder %s13, 3
    %p201 = pnand %p199, %p200
    %p202 = pneg %p201
    // Predicated region
    $region9: #{conv_block_pallas.1} parent=5 // pred_check
      _
    $region10: #{conv_block_pallas.1} parent=5 // pred_check_branch
      %204 = sbr.rel (%p201) target = $region12
    $region11: #{conv_block_pallas.1} parent=5 // pred_region
      %s205 = ssub.s32 %s13, 1
      // Predicated region
      $region13: #{conv_block_pallas.1} parent=11 // pred_check
        %p206 = pneg %p60
      $region14: #{conv_block_pallas.1} parent=11 // pred_check_branch
        %208 = sbr.rel (%p206) target = $region16
      $region15: #{conv_block_pallas.1} parent=11 // pred_region
        _
      $region16: #{conv_block_pallas.1} parent=11 // pred_fallthru
        _
      // Predicated region
      $region17: #{conv_block_pallas.1} parent=11 // pred_check
        %p209 = pneg %p81
      $region18: #{conv_block_pallas.1} parent=11 // pred_check_branch
        %211 = sbr.rel (%p209) target = $region20
      $region19: #{conv_block_pallas.1} parent=11 // pred_region
        _
      $region20: #{conv_block_pallas.1} parent=11 // pred_fallthru
        _
      // Predicated region
      $region21: #{conv_block_pallas.1} parent=11 // pred_check
        %p212 = pneg %p102
      $region22: #{conv_block_pallas.1} parent=11 // pred_check_branch
        %214 = sbr.rel (%p212) target = $region24
      $region23: #{conv_block_pallas.1} parent=11 // pred_region
        _
      $region24: #{conv_block_pallas.1} parent=11 // pred_fallthru
        _
      // Predicated region
      $region25: #{conv_block_pallas.1} parent=11 // pred_check
        %p215 = pneg %p123
      $region26: #{conv_block_pallas.1} parent=11 // pred_check_branch
        %217 = sbr.rel (%p215) target = $region28
      $region27: #{conv_block_pallas.1} parent=11 // pred_region
        _
      $region28: #{conv_block_pallas.1} parent=11 // pred_fallthru
        _
      // Predicated region
      $region29: #{conv_block_pallas.1} parent=11 // pred_check
        %p218 = pneg %p144
      $region30: #{conv_block_pallas.1} parent=11 // pred_check_branch
        %220 = sbr.rel (%p218) target = $region32
      $region31: #{conv_block_pallas.1} parent=11 // pred_region
        _
      $region32: #{conv_block_pallas.1} parent=11 // pred_fallthru
        _
      // Predicated region
      $region33: #{conv_block_pallas.1} parent=11 // pred_check
        %p221 = pneg %p165
      $region34: #{conv_block_pallas.1} parent=11 // pred_check_branch
        %223 = sbr.rel (%p221) target = $region36
      $region35: #{conv_block_pallas.1} parent=11 // pred_region
        _
      $region36: #{conv_block_pallas.1} parent=11 // pred_fallthru
        _
    $region12: #{conv_block_pallas.1} parent=5 // pred_fallthru
      _
    %p224 = scmp.lt.s32.totalorder %s13, 2
    // Predicated region
    $region37: #{conv_block_pallas.1} parent=5 // pred_check
      %p225 = pneg %p224
    $region38: #{conv_block_pallas.1} parent=5 // pred_check_branch
      %227 = sbr.rel (%p225) target = $region40
    $region39: #{conv_block_pallas.1} parent=5 // pred_region
      // Predicated region
      $region41: #{conv_block_pallas.1} parent=39 // pred_check
        %p228 = pneg %p33
      $region42: #{conv_block_pallas.1} parent=39 // pred_check_branch
        %230 = sbr.rel (%p228) target = $region44
      $region43: #{conv_block_pallas.1} parent=39 // pred_region
        %p231 = scmp.lt.s32.totalorder %s13, 1
        %s232 = scalar_select %p231, %s13, 1
        %s233 = smul.addr %s232, 2
        %s234 = smul.addr %s233, 8
        %s235 = scalar_lea.vmem %s0, %s234
      $region44: #{conv_block_pallas.1} parent=39 // pred_fallthru
        _
    $region40: #{conv_block_pallas.1} parent=5 // pred_fallthru
      _
    %p236 = scmp.le.s32.totalorder 1, %s13
    %p237 = scmp.lt.s32.totalorder %s13, 3
    %p238 = pnand %p236, %p237
    %p239 = pneg %p238
    // Predicated region
    $region45: #{conv_block_pallas.1} parent=5 // pred_check
      _
    $region46: #{conv_block_pallas.1} parent=5 // pred_check_branch
      %241 = sbr.rel (%p238) target = $region48
    $region47: #{conv_block_pallas.1} parent=5 // pred_region
      %s242 = ssub.s32 %s13, 1
      %p243 = scmp.lt.s32.totalorder %s18, 1
      %s244 = scalar_select %p243, %s18, 1
      %s245 = smul.addr %s244, 2
      %s246 = smul.addr %s245, 8
      %s247 = scalar_lea.vmem %s0, %s246
      %p248 = pneg %p39
      %p249 = pneg %p36
      %p250 = pneg %p60
      %p251 = pneg %p57
      %p252 = pneg %p81
      %p253 = pneg %p78
      %p254 = pneg %p102
      %p255 = pneg %p99
      %p256 = pneg %p123
      %p257 = pneg %p120
      %p258 = pneg %p144
      %p259 = pneg %p141
      %p260 = pneg %p165
      %p261 = pneg %p162
      %p262 = pneg %p191
      %p263 = pneg %p188
      %p264 = scmp.lt.s32.totalorder %s18, 1
      %s265 = scalar_select %p264, %s18, 1
      %s266 = smul.addr %s265, 2
      %s267 = smul.addr %s266, 8
      %s268 = scalar_lea.vmem %s7, %s267
      %p269 = scmp.lt.s32.totalorder %s18, 1
      %s270 = scalar_select %p269, %s18, 1
      %s271 = smul.addr %s270, 2
      %s272 = smul.addr %s271, 8
      %s273 = scalar_lea.vmem %s0, %s272
      %p274 = scmp.lt.s32.totalorder %s18, 1
      %s275 = scalar_select %p274, %s18, 1
      %s276 = smul.addr %s275, 2
      %s277 = smul.addr %s276, 8
      %s278 = scalar_lea.vmem %s7, %s277
      %v279 = vld [vmem:[%s1] sm:$0xff]
      %v280 = vld [vmem:[%s4] sm:$0xff]
      %v281 = vld [vmem:[%s2] sm:$0xff]
      %v282 = vld [vmem:[%s3] sm:$0xff]
      %v283 = vld [vmem:[%s5] sm:$0xff]
      %v284 = vld [vmem:[%s6] sm:$0x3]
      %v285 = vld [vmem:[%s6 + $0x2] sm:$0x3]
      %v286 = vld [vmem:[%s6 + $0x4] sm:$0x3]
      %v287 = vld [vmem:[%s6 + $0x6] sm:$0x3]
      %v288 = vld [vmem:[%s6 + $0x8] sm:$0x3]
      %v289 = vld [vmem:[%s6 + $0xa] sm:$0x3]
      %v290 = vld [vmem:[%s6 + $0xc] sm:$0x3]
      %v291 = vld [vmem:[%s6 + $0xe] sm:$0x3]
      %v292 = vld [vmem:[%s6 + $0x10] sm:$0x3]
      %v293 = vld [vmem:[%s273] sm:$0xff]
      %v294 = vld [vmem:[%s273 + $0x8] sm:$0xff]
      %295 = vrot.lane.b32.xlu0 %v293, 17
      %v296 = vpop.permute.xlu0 %295
      %297 = vrot.lane.b32.xlu0 %v294, 17
      %v298 = vpop.permute.xlu0 %297
      %v299 = vlaneseq
      %v300 = vand.u32 %v299, 127
      %vm301 = vcmp.lt.s32.totalorder %v300, 17
      %v302 = vsel %vm301, %v296, %v298
      %v303 = vsel %vm301, %v298, %v296
      %v305 = vperm.slane %v284, 0
      %v306 = vperm.slane %v284, 1
      %v309 = vmul.f32 %v303, %v305
      %v310 = vmul.f32 %v302, %v306
      %311 = vst [vmem:[#allocation2] sm:$0xff] %v309
      %312 = vst [vmem:[#allocation2 + $0x8] sm:$0xff] %v310
      %313 = vrot.lane.b32.xlu0 %v293, 16
      %v314 = vpop.permute.xlu0 %313
      %315 = vrot.lane.b32.xlu0 %v294, 16
      %v316 = vpop.permute.xlu0 %315
      %vm317 = vcmp.lt.s32.totalorder %v300, 16
      %v318 = vsel %vm317, %v314, %v316
      %v319 = vsel %vm317, %v316, %v314
      %v321 = vperm.slane %v285, 0
      %v322 = vperm.slane %v285, 1
      %v325 = vmul.f32 %v319, %v321
      %v326 = vmul.f32 %v318, %v322
      %327 = vst [vmem:[#allocation2 + $0x10] sm:$0xff] %v325
      %328 = vst [vmem:[#allocation2 + $0x18] sm:$0xff] %v326
      %329 = vrot.lane.b32.xlu0 %v293, 15
      %v330 = vpop.permute.xlu0 %329
      %331 = vrot.lane.b32.xlu0 %v294, 15
      %v332 = vpop.permute.xlu0 %331
      %vm333 = vcmp.lt.s32.totalorder %v300, 15
      %v334 = vsel %vm333, %v330, %v332
      %v335 = vsel %vm333, %v332, %v330
      %v337 = vperm.slane %v286, 0
      %v338 = vperm.slane %v286, 1
      %v341 = vmul.f32 %v335, %v337
      %v342 = vmul.f32 %v334, %v338
      %343 = vst [vmem:[#allocation2 + $0x20] sm:$0xff] %v341
      %344 = vst [vmem:[#allocation2 + $0x28] sm:$0xff] %v342
      %345 = vrot.lane.b32.xlu0 %v293, 1
      %v346 = vpop.permute.xlu0 %345
      %347 = vrot.lane.b32.xlu0 %v294, 1
      %v348 = vpop.permute.xlu0 %347
      %vm349 = vcmp.lt.s32.totalorder %v300, 1
      %v350 = vsel %vm349, %v346, %v348
      %v351 = vsel %vm349, %v348, %v346
      %v353 = vperm.slane %v287, 0
      %v354 = vperm.slane %v287, 1
      %v357 = vmul.f32 %v351, %v353
      %v358 = vmul.f32 %v350, %v354
      %359 = vst [vmem:[#allocation2 + $0x30] sm:$0xff] %v357
      %360 = vst [vmem:[#allocation2 + $0x38] sm:$0xff] %v358
      %v362 = vperm.slane %v288, 0
      %v363 = vperm.slane %v288, 1
      %v366 = vmul.f32 %v293, %v362
      %v367 = vmul.f32 %v294, %v363
      %368 = vst [vmem:[#allocation2 + $0x40] sm:$0xff] %v366
      %369 = vst [vmem:[#allocation2 + $0x48] sm:$0xff] %v367
      %370 = vrot.lane.b32.xlu0 %v293, 127
      %v371 = vpop.permute.xlu0 %370
      %372 = vrot.lane.b32.xlu0 %v294, 127
      %v373 = vpop.permute.xlu0 %372
      %vm374 = vcmp.lt.s32.totalorder %v300, 127
      %v375 = vsel %vm374, %v371, %v373
      %v376 = vsel %vm374, %v373, %v371
      %v378 = vperm.slane %v289, 0
      %v379 = vperm.slane %v289, 1
      %v382 = vmul.f32 %v375, %v378
      %v383 = vmul.f32 %v376, %v379
      %384 = vst [vmem:[#allocation2 + $0x50] sm:$0xff] %v382
      %385 = vst [vmem:[#allocation2 + $0x58] sm:$0xff] %v383
      %386 = vrot.lane.b32.xlu0 %v293, 113
      %v387 = vpop.permute.xlu0 %386
      %388 = vrot.lane.b32.xlu0 %v294, 113
      %v389 = vpop.permute.xlu0 %388
      %vm390 = vcmp.lt.s32.totalorder %v300, 113
      %v391 = vsel %vm390, %v387, %v389
      %v392 = vsel %vm390, %v389, %v387
      %v394 = vperm.slane %v290, 0
      %v395 = vperm.slane %v290, 1
      %v398 = vmul.f32 %v391, %v394
      %v399 = vmul.f32 %v392, %v395
      %400 = vst [vmem:[#allocation2 + $0x60] sm:$0xff] %v398
      %401 = vst [vmem:[#allocation2 + $0x68] sm:$0xff] %v399
      %402 = vrot.lane.b32.xlu0 %v293, 112
      %v403 = vpop.permute.xlu0 %402
      %404 = vrot.lane.b32.xlu0 %v294, 112
      %v405 = vpop.permute.xlu0 %404
      %vm406 = vcmp.lt.s32.totalorder %v300, 112
      %v407 = vsel %vm406, %v403, %v405
      %v408 = vsel %vm406, %v405, %v403
      %v410 = vperm.slane %v291, 0
      %v411 = vperm.slane %v291, 1
      %v414 = vmul.f32 %v407, %v410
      %v415 = vmul.f32 %v408, %v411
      %416 = vst [vmem:[#allocation2 + $0x70] sm:$0xff] %v414
      %417 = vst [vmem:[#allocation2 + $0x78] sm:$0xff] %v415
      %418 = vrot.lane.b32.xlu0 %v293, 111
      %v419 = vpop.permute.xlu0 %418
      %420 = vrot.lane.b32.xlu0 %v294, 111
      %v421 = vpop.permute.xlu0 %420
      %vm422 = vcmp.lt.s32.totalorder %v300, 111
      %v423 = vsel %vm422, %v419, %v421
      %v424 = vsel %vm422, %v421, %v419
      %v426 = vperm.slane %v292, 0
      %v427 = vperm.slane %v292, 1
      %v430 = vmul.f32 %v423, %v426
      %v431 = vmul.f32 %v424, %v427
      %432 = vst [vmem:[#allocation2 + $0x80] sm:$0xff] %v430
      %433 = vst [vmem:[#allocation2 + $0x88] sm:$0xff] %v431
      %v434 = vld [vmem:[#allocation2] sm:$0xff]
      %v435 = vld [vmem:[#allocation2 + $0x8] sm:$0xff]
      %v436 = vld [vmem:[#allocation2 + $0x10] sm:$0xff]
      %v437 = vld [vmem:[#allocation2 + $0x18] sm:$0xff]
      %v438 = vld [vmem:[#allocation2 + $0x20] sm:$0xff]
      %v439 = vld [vmem:[#allocation2 + $0x28] sm:$0xff]
      %v440 = vld [vmem:[#allocation2 + $0x30] sm:$0xff]
      %v441 = vld [vmem:[#allocation2 + $0x38] sm:$0xff]
      %v442 = vld [vmem:[#allocation2 + $0x40] sm:$0xff]
      %v443 = vld [vmem:[#allocation2 + $0x48] sm:$0xff]
      %v444 = vld [vmem:[#allocation2 + $0x50] sm:$0xff]
      %v445 = vld [vmem:[#allocation2 + $0x58] sm:$0xff]
      %v446 = vld [vmem:[#allocation2 + $0x60] sm:$0xff]
      %v447 = vld [vmem:[#allocation2 + $0x68] sm:$0xff]
      %v448 = vld [vmem:[#allocation2 + $0x70] sm:$0xff]
      %v449 = vld [vmem:[#allocation2 + $0x78] sm:$0xff]
      %v450 = vld [vmem:[#allocation2 + $0x80] sm:$0xff]
      %v451 = vld [vmem:[#allocation2 + $0x88] sm:$0xff]
      %vm452 = vcmask 588800
      %v454 = vsel %vm452, %v279, 0
      %456 = vmatpush.msra.mxu0 0.0
      %457 = vmatpush.msra.mxu0 0.0
      %458 = vmatpush.msra.mxu0 0.0
      %459 = vmatpush.msra.mxu0 0.0
      %460 = vmatpush.msra.mxu0 0.0
      %461 = vmatpush.msra.mxu0 0.0
      %462 = vmatpush.msra.mxu0 0.0
      %463 = vmatpush.msra.mxu0 %v450
      %464 = vmatpush.msra.mxu0 %v448
      %465 = vmatpush.msra.mxu0 %v446
      %466 = vmatpush.msra.mxu0 %v444
      %467 = vmatpush.msra.mxu0 %v442
      %468 = vmatpush.msra.mxu0 %v440
      %469 = vmatpush.msra.mxu0 %v438
      %470 = vmatpush.msra.mxu0 %v436
      %471 = vmatpush.msra.mxu0 %v434
      %472 = vmatmul.f32.gmra.mxu0 %v454
      %v473 = vpop.f32.mrf.mxu0
      %v474 = vadd.f32 0.0, %v473
      %475 = vdwg.mxu0
      %476 = vmatpush.msra.mxu0 0.0
      %477 = vmatpush.msra.mxu0 0.0
      %478 = vmatpush.msra.mxu0 0.0
      %479 = vmatpush.msra.mxu0 0.0
      %480 = vmatpush.msra.mxu0 0.0
      %481 = vmatpush.msra.mxu0 0.0
      %482 = vmatpush.msra.mxu0 0.0
      %483 = vmatpush.msra.mxu0 %v451
      %484 = vmatpush.msra.mxu0 %v449
      %485 = vmatpush.msra.mxu0 %v447
      %486 = vmatpush.msra.mxu0 %v445
      %487 = vmatpush.msra.mxu0 %v443
      %488 = vmatpush.msra.mxu0 %v441
      %489 = vmatpush.msra.mxu0 %v439
      %490 = vmatpush.msra.mxu0 %v437
      %491 = vmatpush.msra.mxu0 %v435
      %492 = vmatmul.f32.gmra.mxu0 %v454
      %v493 = vpop.f32.mrf.mxu0
      %v494 = vadd.f32 0.0, %v493
      %495 = vdwg.mxu0
      %v496 = vadd.f32 %v474, %v494
      %497 = vadd.xlane.f32.xlu0 %v496
      %v498 = vpop.xlane.xlu0 %497
      %v499 = vmul.f32 %v498, 0.00390625
      %v500 = vmul.f32 %v474, %v474
      %v501 = vmul.f32 %v494, %v494
      %v502 = vadd.f32 %v500, %v501
      %503 = vadd.xlane.f32.xlu0 %v502
      %v504 = vpop.xlane.xlu0 %503
      %v505 = vmul.f32 %v504, 0.00390625
      %v506 = vmul.f32 %v499, %v499
      %v507 = vsub.f32 %v505, %v506
      %v508 = vadd.f32 %v507, 1e-06
      %v509 = vrsqrt.pop %v508
      %v510 = vmul.f32 %v509, %v508
      %v511 = vmul.f32 %v510, %v509
      %v512 = vmul.f32 0.5, %v511
      %v513 = vsub.f32 1.5, %v512
      %v514 = vmul.f32 %v509, %v513
      %vm515 = vweird.f32 %v508
      %vm516 = vweird.f32 %v509
      %vm517 = vmor %vm515, %vm516
      %v518 = vsel %vm517, %v509, %v514
      %v519 = vmul.f32 %v518, %v281
      %v520 = vmul.f32 %v499, %v519
      %v521 = vsub.f32 %v282, %v520
      %523 = vset.pattern.permute.xlu0 0
      %524 = vperm.xlu0 %523, %v519
      %v525 = vpop.permute.xlu0 %524
      %v527 = vmul.f32 %v474, %v525
      %v528 = vmul.f32 %v494, %v525
      %530 = vset.pattern.permute.xlu0 0
      %531 = vperm.xlu0 %530, %v521
      %v532 = vpop.permute.xlu0 %531
      %v534 = vadd.f32 %v527, %v532
      %v535 = vadd.f32 %v528, %v532
      %vm536 = vcmp.gt.f32.partialorder %v534, 0.0
      %vm537 = vcmp.gt.f32.partialorder %v535, 0.0
      %v538 = vmul.f32 %v534, 1.442695
      %v539 = vpow.pop %v538
      %v540 = vmul.f32 %v535, 1.442695
      %v541 = vpow.pop %v540
      %v542 = vsub.f32 %v539, 1.0
      %v543 = vsub.f32 %v541, 1.0
      %v544 = vsel %vm536, %v534, %v542
      %v545 = vsel %vm537, %v535, %v543
      %546 = vrot.lane.b32.xlu0 %v544, 17
      %v547 = vpop.permute.xlu0 %546
      %548 = vrot.lane.b32.xlu0 %v545, 17
      %v549 = vpop.permute.xlu0 %548
      %v550 = vsel %vm301, %v547, %v549
      %v551 = vsel %vm301, %v549, %v547
      %v552 = vmul.f32 %v551, %v305
      %v553 = vmul.f32 %v550, %v306
      %554 = vst [vmem:[#allocation2] sm:$0xff] %v552
      %555 = vst [vmem:[#allocation2 + $0x8] sm:$0xff] %v553
      %556 = vrot.lane.b32.xlu0 %v544, 16
      %v557 = vpop.permute.xlu0 %556
      %558 = vrot.lane.b32.xlu0 %v545, 16
      %v559 = vpop.permute.xlu0 %558
      %v560 = vsel %vm317, %v557, %v559
      %v561 = vsel %vm317, %v559, %v557
      %v562 = vmul.f32 %v561, %v321
      %v563 = vmul.f32 %v560, %v322
      %564 = vst [vmem:[#allocation2 + $0x10] sm:$0xff] %v562
      %565 = vst [vmem:[#allocation2 + $0x18] sm:$0xff] %v563
      %566 = vrot.lane.b32.xlu0 %v544, 15
      %v567 = vpop.permute.xlu0 %566
      %568 = vrot.lane.b32.xlu0 %v545, 15
      %v569 = vpop.permute.xlu0 %568
      %v570 = vsel %vm333, %v567, %v569
      %v571 = vsel %vm333, %v569, %v567
      %v572 = vmul.f32 %v571, %v337
      %v573 = vmul.f32 %v570, %v338
      %574 = vst [vmem:[#allocation2 + $0x20] sm:$0xff] %v572
      %575 = vst [vmem:[#allocation2 + $0x28] sm:$0xff] %v573
      %576 = vrot.lane.b32.xlu0 %v544, 1
      %v577 = vpop.permute.xlu0 %576
      %578 = vrot.lane.b32.xlu0 %v545, 1
      %v579 = vpop.permute.xlu0 %578
      %v580 = vsel %vm349, %v577, %v579
      %v581 = vsel %vm349, %v579, %v577
      %v582 = vmul.f32 %v581, %v353
      %v583 = vmul.f32 %v580, %v354
      %584 = vst [vmem:[#allocation2 + $0x30] sm:$0xff] %v582
      %585 = vst [vmem:[#allocation2 + $0x38] sm:$0xff] %v583
      %v586 = vmul.f32 %v544, %v362
      %v587 = vmul.f32 %v545, %v363
      %588 = vst [vmem:[#allocation2 + $0x40] sm:$0xff] %v586
      %589 = vst [vmem:[#allocation2 + $0x48] sm:$0xff] %v587
      %590 = vrot.lane.b32.xlu0 %v544, 127
      %v591 = vpop.permute.xlu0 %590
      %592 = vrot.lane.b32.xlu0 %v545, 127
      %v593 = vpop.permute.xlu0 %592
      %v594 = vsel %vm374, %v591, %v593
      %v595 = vsel %vm374, %v593, %v591
      %v596 = vmul.f32 %v594, %v378
      %v597 = vmul.f32 %v595, %v379
      %598 = vst [vmem:[#allocation2 + $0x50] sm:$0xff] %v596
      %599 = vst [vmem:[#allocation2 + $0x58] sm:$0xff] %v597
      %600 = vrot.lane.b32.xlu0 %v544, 113
      %v601 = vpop.permute.xlu0 %600
      %602 = vrot.lane.b32.xlu0 %v545, 113
      %v603 = vpop.permute.xlu0 %602
      %v604 = vsel %vm390, %v601, %v603
      %v605 = vsel %vm390, %v603, %v601
      %v606 = vmul.f32 %v604, %v394
      %v607 = vmul.f32 %v605, %v395
      %608 = vst [vmem:[#allocation2 + $0x60] sm:$0xff] %v606
      %609 = vst [vmem:[#allocation2 + $0x68] sm:$0xff] %v607
      %610 = vrot.lane.b32.xlu0 %v544, 112
      %v611 = vpop.permute.xlu0 %610
      %612 = vrot.lane.b32.xlu0 %v545, 112
      %v613 = vpop.permute.xlu0 %612
      %v614 = vsel %vm406, %v611, %v613
      %v615 = vsel %vm406, %v613, %v611
      %v616 = vmul.f32 %v614, %v410
      %v617 = vmul.f32 %v615, %v411
      %618 = vst [vmem:[#allocation2 + $0x70] sm:$0xff] %v616
      %619 = vst [vmem:[#allocation2 + $0x78] sm:$0xff] %v617
      %620 = vrot.lane.b32.xlu0 %v544, 111
      %v621 = vpop.permute.xlu0 %620
      %622 = vrot.lane.b32.xlu0 %v545, 111
      %v623 = vpop.permute.xlu0 %622
      %v624 = vsel %vm422, %v621, %v623
      %v625 = vsel %vm422, %v623, %v621
      %v626 = vmul.f32 %v624, %v426
      %v627 = vmul.f32 %v625, %v427
      %628 = vst [vmem:[#allocation2 + $0x80] sm:$0xff] %v626
      %629 = vst [vmem:[#allocation2 + $0x88] sm:$0xff] %v627
      %v630 = vld [vmem:[#allocation2] sm:$0xff]
      %v631 = vld [vmem:[#allocation2 + $0x8] sm:$0xff]
      %v632 = vld [vmem:[#allocation2 + $0x10] sm:$0xff]
      %v633 = vld [vmem:[#allocation2 + $0x18] sm:$0xff]
      %v634 = vld [vmem:[#allocation2 + $0x20] sm:$0xff]
      %v635 = vld [vmem:[#allocation2 + $0x28] sm:$0xff]
      %v636 = vld [vmem:[#allocation2 + $0x30] sm:$0xff]
      %v637 = vld [vmem:[#allocation2 + $0x38] sm:$0xff]
      %v638 = vld [vmem:[#allocation2 + $0x40] sm:$0xff]
      %v639 = vld [vmem:[#allocation2 + $0x48] sm:$0xff]
      %v640 = vld [vmem:[#allocation2 + $0x50] sm:$0xff]
      %v641 = vld [vmem:[#allocation2 + $0x58] sm:$0xff]
      %v642 = vld [vmem:[#allocation2 + $0x60] sm:$0xff]
      %v643 = vld [vmem:[#allocation2 + $0x68] sm:$0xff]
      %v644 = vld [vmem:[#allocation2 + $0x70] sm:$0xff]
      %v645 = vld [vmem:[#allocation2 + $0x78] sm:$0xff]
      %v646 = vld [vmem:[#allocation2 + $0x80] sm:$0xff]
      %v647 = vld [vmem:[#allocation2 + $0x88] sm:$0xff]
      %649 = vset.pattern.permute.xlu0 0
      %650 = vperm.xlu0 %649, %v283
      %v651 = vpop.permute.xlu0 %650
      %v654 = vsel %vm452, %v280, 0
      %656 = vmatpush.msra.mxu0 0.0
      %657 = vmatpush.msra.mxu0 0.0
      %658 = vmatpush.msra.mxu0 0.0
      %659 = vmatpush.msra.mxu0 0.0
      %660 = vmatpush.msra.mxu0 0.0
      %661 = vmatpush.msra.mxu0 0.0
      %662 = vmatpush.msra.mxu0 0.0
      %663 = vmatpush.msra.mxu0 %v646
      %664 = vmatpush.msra.mxu0 %v644
      %665 = vmatpush.msra.mxu0 %v642
      %666 = vmatpush.msra.mxu0 %v640
      %667 = vmatpush.msra.mxu0 %v638
      %668 = vmatpush.msra.mxu0 %v636
      %669 = vmatpush.msra.mxu0 %v634
      %670 = vmatpush.msra.mxu0 %v632
      %671 = vmatpush.msra.mxu0 %v630
      %672 = vmatmul.f32.gmra.mxu0 %v654
      %v673 = vpop.f32.mrf.mxu0
      %v674 = vadd.f32 %v651, %v673
      %675 = vdwg.mxu0
      %676 = vmatpush.msra.mxu0 0.0
      %677 = vmatpush.msra.mxu0 0.0
      %678 = vmatpush.msra.mxu0 0.0
      %679 = vmatpush.msra.mxu0 0.0
      %680 = vmatpush.msra.mxu0 0.0
      %681 = vmatpush.msra.mxu0 0.0
      %682 = vmatpush.msra.mxu0 0.0
      %683 = vmatpush.msra.mxu0 %v647
      %684 = vmatpush.msra.mxu0 %v645
      %685 = vmatpush.msra.mxu0 %v643
      %686 = vmatpush.msra.mxu0 %v641
      %687 = vmatpush.msra.mxu0 %v639
      %688 = vmatpush.msra.mxu0 %v637
      %689 = vmatpush.msra.mxu0 %v635
      %690 = vmatpush.msra.mxu0 %v633
      %691 = vmatpush.msra.mxu0 %v631
      %692 = vmatmul.f32.gmra.mxu0 %v654
      %v693 = vpop.f32.mrf.mxu0
      %v694 = vadd.f32 %v651, %v693
      %695 = vdwg.mxu0
      %696 = vst [vmem:[%s278] sm:$0xff] %v674
      %697 = vst [vmem:[%s278 + $0x8] sm:$0xff] %v694
      %p698 = scmp.lt.s32.totalorder %s18, 1
      %s699 = scalar_select %p698, %s18, 1
      %s700 = smul.addr %s699, 2
      %s701 = smul.addr %s700, 8
      %s702 = scalar_lea.vmem %s7, %s701
      // Predicated region
      $region49: #{conv_block_pallas.1} parent=47 // pred_check
        %p703 = pneg %p188
      $region50: #{conv_block_pallas.1} parent=47 // pred_check_branch
        %705 = sbr.rel (%p703) target = $region52
      $region51: #{conv_block_pallas.1} parent=47 // pred_region
        _
      $region52: #{conv_block_pallas.1} parent=47 // pred_fallthru
        _
    $region48: #{conv_block_pallas.1} parent=5 // pred_fallthru
      _
    %p706 = scmp.le.s32.totalorder 2, %s13
    // Predicated region
    $region53: #{conv_block_pallas.1} parent=5 // pred_check
      %p707 = pneg %p706
    $region54: #{conv_block_pallas.1} parent=5 // pred_check_branch
      %709 = sbr.rel (%p707) target = $region56
    $region55: #{conv_block_pallas.1} parent=5 // pred_region
      %s710 = ssub.s32 %s13, 2
      // Predicated region
      $region57: #{conv_block_pallas.1} parent=55 // pred_check
        %p711 = pneg %p194
      $region58: #{conv_block_pallas.1} parent=55 // pred_check_branch
        %713 = sbr.rel (%p711) target = $region60
      $region59: #{conv_block_pallas.1} parent=55 // pred_region
        %p714 = scmp.lt.s32.totalorder %s19, 1
        %s715 = scalar_select %p714, %s19, 1
        %s716 = smul.addr %s715, 2
        %s717 = smul.addr %s716, 8
        %s718 = scalar_lea.vmem %s7, %s717
      $region60: #{conv_block_pallas.1} parent=55 // pred_fallthru
        _
    $region56: #{conv_block_pallas.1} parent=5 // pred_fallthru
      _
  $region6: #{conv_block_pallas.1} parent=0 // loop_footer
    %s17 = sadd.s32 1, %s13
  $region7: #{conv_block_pallas.1} parent=0 // loop_footer_branch
    %12 = sbr.rel target = $region3
  $region8: #{conv_block_pallas.1} parent=0 // loop_exit
    _

</llo_original>
